<compile_context>
chip_gen: v5e
topology: v5e:2x2
jax: 0.10.0
libtpu: 0.0.40
codegen_flags: <defaults>
</compile_context>

<pallas_src>
import functools

import jax
import jax.numpy as jnp
from jax.experimental import pallas as pl
from jax.experimental.pallas import tpu as pltpu

_EPS = 1e-6  # F.pairwise_distance default eps (added to the difference)


def _round_up(x, m):
    return (x + m - 1) // m * m


def _cdiv(a, b):
    return (a + b - 1) // b


def _contrastive_loss_kernel(o1_ref, o2_ref, label_ref, out_ref, acc_ref, *,
                             margin, true_b, tb, tiles_per_core):
    """One (tb, D) batch tile. Grid = (num_cores, tiles_per_core).

    acc_ref (tb, 1) holds per-row partial sums (pure VPU add per step); the
    cross-sublane reduce and the output store happen only on the last step.
    """
    c = pl.program_id(0)
    i = pl.program_id(1)
    g = c * tiles_per_core + i        # unclamped global tile id (for masking)

    @pl.when(i == 0)
    def _():
        acc_ref[...] = jnp.zeros_like(acc_ref)

    o1 = o1_ref[...].astype(jnp.float32)          # (tb, D)
    o2 = o2_ref[...].astype(jnp.float32)          # (tb, D)
    lbl = label_ref[...].astype(jnp.float32)      # (tb, 1)

    # Pairwise (Euclidean) distance along the feature dim.
    diff = o1 - o2 + _EPS                         # eps added to the difference
    sq_dist = jnp.sum(diff * diff, axis=-1, keepdims=True)   # (tb, 1)

    # Positive term uses the squared distance directly (avoids sqrt->square
    # round trip); sqrt only feeds the hinge branch.
    dist = jnp.sqrt(sq_dist)                      # (tb, 1)
    hinge = jnp.maximum(margin - dist, 0.0)
    per_row = (1.0 - lbl) * sq_dist + lbl * (hinge * hinge)  # (tb, 1)

    # Mask rows past the true batch: the overhanging last block and any
    # redundant (clamped) tile on the second core read garbage, but jnp.where
    # is a select, so NaN/Inf garbage does not propagate.
    row_ids = jax.lax.broadcasted_iota(jnp.int32, per_row.shape, 0) + g * tb
    per_row = jnp.where(row_ids < true_b, per_row, 0.0)

    # Elementwise accumulate — no per-step cross-sublane reduce, no scalar
    # loop-carried dependency.
    acc_ref[...] = acc_ref[...] + per_row

    @pl.when(i == pl.num_programs(1) - 1)
    def _():
        total = jnp.sum(acc_ref[...], axis=0, keepdims=True)   # (1, 1)
        out_ref[...] = total.reshape(1, 1, 1)


def contrastive_loss(output1, output2, label, margin=2.0, *, block_rows=None):
    """output1, output2: (B, D); label: (B, 1). Returns scalar f32.

    Inputs may be f32 or bf16; accumulation happens in f32 inside the kernel.
    `block_rows` is a test/tuning override that caps the row-tile size.
    """
    B, D = output1.shape
    assert output2.shape == (B, D)
    assert label.shape == (B, 1)

    itemsize = jnp.dtype(output1.dtype).itemsize

    # Row-tile size: largest multiple of 8 whose per-core VMEM footprint
    #   2 inputs x 2 pipeline buffers x (tb x D x itemsize)
    #   + 2 lane-padded (tb, 1) label buffers (~512 B/row)
    #   + 1 lane-padded (tb, 1) accumulator    (~512 B/row)
    # stays under ~24 MiB — comfortably inside the 40 MiB scoped limit on v7x
    # (64 MiB physical VMEM) and trivially so on v5e/v6e (128 MiB).
    budget = 24 * 1024 * 1024
    bytes_per_row = 2 * 2 * D * itemsize + 3 * 512
    tb = (budget // bytes_per_row) // 8 * 8
    tb = max(8, min(tb, _round_up(B, 8)))
    if block_rows is not None:
        tb = max(8, min(tb, _round_up(block_rows, 8)))
    tb = int(tb)
    # TODO(synk): for very large D (8*D*itemsize >> budget) add a feature-dim
    # grid axis with per-row partial accumulation instead of one huge tile.

    # No wrapper-side padding: the final block may overhang the array, and the
    # second core's possibly-redundant tile is clamped in the index_map; both
    # are neutralized by the in-kernel row mask.
    total_tiles = _cdiv(B, tb)
    num_cores = 2 if total_tiles >= 2 else 1   # v7x: 2 TCs; harmless on v5e/v6e
    tiles_per_core = _cdiv(total_tiles, num_cores)
    grid = (num_cores, tiles_per_core)

    def row_map(c, i):
        g = c * tiles_per_core + i
        return (jnp.minimum(g, total_tiles - 1), 0)   # never a fully-OOB block

    kernel = functools.partial(
        _contrastive_loss_kernel, margin=float(margin), true_b=B, tb=tb,
        tiles_per_core=tiles_per_core)

    cost = pl.CostEstimate(
        flops=4 * B * D,
        transcendentals=B,                                  # the per-row sqrt
        bytes_accessed=2 * B * D * itemsize
        + B * jnp.dtype(label.dtype).itemsize + num_cores * 4)

    partials = pl.pallas_call(
        kernel,
        out_shape=jax.ShapeDtypeStruct((num_cores, 1, 1), jnp.float32),
        grid_spec=pltpu.PrefetchScalarGridSpec(
            num_scalar_prefetch=0,
            grid=grid,
            in_specs=[
                pl.BlockSpec((tb, D), row_map),
                pl.BlockSpec((tb, D), row_map),
                pl.BlockSpec((tb, 1), row_map),
            ],
            out_specs=pl.BlockSpec((1, 1, 1), lambda c, i: (c, 0, 0)),
            scratch_shapes=[pltpu.VMEM((tb, 1), jnp.float32)],
        ),
        compiler_params=pltpu.CompilerParams(
            dimension_semantics=("parallel", "arbitrary"),
            vmem_limit_bytes=40 * 1024 * 1024,
        ),
        cost_estimate=cost,
    )(output1, output2, label)

    # Combine the per-core partial sums and take the mean.
    return jnp.sum(partials) * jnp.float32(1.0 / B)


def _reference_loss(output1, output2, label, margin=2.0):
    # Pure-JAX reference mirroring torch semantics.
    diff = output1.astype(jnp.float32) - output2.astype(jnp.float32) + _EPS
    dist = jnp.sqrt(jnp.sum(diff * diff, axis=-1, keepdims=True))
    loss = (1.0 - label) * dist ** 2 \
        + label * jnp.maximum(margin - dist, 0.0) ** 2
    return jnp.mean(loss)


if __name__ == "__main__":
    key = jax.random.PRNGKey(0)
    ks = jax.random.split(key, 9)

    # Case 1: small, tile-aligned shapes (batch of embedding pairs + labels).
    B, D = 8, 32
    o1 = jax.random.normal(ks[0], (B, D), dtype=jnp.float32)
    o2 = jax.random.normal(ks[1], (B, D), dtype=jnp.float32)
    lbl = jax.random.bernoulli(ks[2], p=0.5, shape=(B, 1)).astype(jnp.float32)

    loss = jax.block_until_ready(contrastive_loss(o1, o2, lbl, margin=2.0))
    ref = _reference_loss(o1, o2, lbl, margin=2.0)
    assert jnp.allclose(loss, ref, rtol=1e-5, atol=1e-5), (loss, ref)

    # Case 2: batch not a multiple of the tile — exercises the un-padded
    # overhanging final block + in-kernel row mask.
    B2, D2 = 10, 32
    o1b = jax.random.normal(ks[3], (B2, D2), dtype=jnp.float32)
    o2b = jax.random.normal(ks[4], (B2, D2), dtype=jnp.float32)
    lblb = jax.random.bernoulli(ks[5], p=0.5, shape=(B2, 1)).astype(jnp.float32)

    loss2 = jax.block_until_ready(contrastive_loss(o1b, o2b, lblb, margin=2.0))
    ref2 = _reference_loss(o1b, o2b, lblb, margin=2.0)
    assert jnp.allclose(loss2, ref2, rtol=1e-5, atol=1e-5), (loss2, ref2)

    # Case 3: multi-tile path with the 2-way "parallel" core split and a
    # clamped redundant tile (forced small tile size via block_rows).
    B3, D3 = 20, 32
    o1c = jax.random.normal(ks[6], (B3, D3), dtype=jnp.float32)
    o2c = jax.random.normal(ks[7], (B3, D3), dtype=jnp.float32)
    lblc = jax.random.bernoulli(ks[8], p=0.5, shape=(B3, 1)).astype(jnp.float32)

    loss3 = jax.block_until_ready(
        contrastive_loss(o1c, o2c, lblc, margin=2.0, block_rows=8))
    ref3 = _reference_loss(o1c, o2c, lblc, margin=2.0)
    assert jnp.allclose(loss3, ref3, rtol=1e-5, atol=1e-5), (loss3, ref3)

    print("KERNEL_OK")
</pallas_src>

<mosaic_0001>
module attributes {stable_mosaic.version = 11 : i64} {
  func.func @_contrastive_loss_kernel(%arg0: i32, %arg1: i32, %arg2: memref<8x32xf32, #tpu.memory_space<vmem>>, %arg3: memref<8x32xf32, #tpu.memory_space<vmem>>, %arg4: memref<8x1xf32, #tpu.memory_space<vmem>>, %arg5: memref<1x1x1xf32, #tpu.memory_space<vmem>>, %arg6: memref<8x1xf32, #tpu.memory_space<vmem>>) attributes {dimension_semantics = [#tpu.dimension_semantics<parallel>, #tpu.dimension_semantics<arbitrary>], iteration_bounds = array<i64: 1, 1>, scalar_prefetch = 0 : i64, scratch_operands = 1 : i64, tpu.core_type = #tpu.core_type<tc>, window_params = [{transform_indices = @transform_0, window_bounds = array<i64: 8, 32>}, {transform_indices = @transform_1, window_bounds = array<i64: 8, 32>}, {transform_indices = @transform_2, window_bounds = array<i64: 8, 1>}, {transform_indices = @transform_3, window_bounds = array<i64: 1, 1, 1>}]} {
    %c1_i32 = arith.constant 1 : i32
    %0 = arith.muli %arg0, %c1_i32 : i32
    %1 = arith.addi %0, %arg1 : i32
    %c0_i32 = arith.constant 0 : i32
    %2 = arith.cmpi eq, %arg1, %c0_i32 : i32
    %3 = arith.extui %2 : i1 to i32
    %c0_i32_0 = arith.constant 0 : i32
    %4 = arith.cmpi ne, %3, %c0_i32_0 : i32
    scf.if %4 {
      %cst_18 = arith.constant 0.000000e+00 : f32
      %39 = vector.broadcast %cst_18 : f32 to vector<8x1xf32>
      %c0_19 = arith.constant 0 : index
      %c0_20 = arith.constant 0 : index
      %40 = vector.load %arg6[%c0_19, %c0_20] : memref<8x1xf32, #tpu.memory_space<vmem>>, vector<8x1xf32>
      tpu.vector_store %arg6[%c0_19, %c0_20], %39 {strides = array<i32>} : memref<8x1xf32, #tpu.memory_space<vmem>>, vector<8x1xf32>,
    } else {
    }
    %c0 = arith.constant 0 : index
    %c0_1 = arith.constant 0 : index
    %5 = vector.load %arg2[%c0, %c0_1] : memref<8x32xf32, #tpu.memory_space<vmem>>, vector<8x32xf32>
    %c0_2 = arith.constant 0 : index
    %c0_3 = arith.constant 0 : index
    %6 = vector.load %arg3[%c0_2, %c0_3] : memref<8x32xf32, #tpu.memory_space<vmem>>, vector<8x32xf32>
    %c0_4 = arith.constant 0 : index
    %c0_5 = arith.constant 0 : index
    %7 = vector.load %arg4[%c0_4, %c0_5] : memref<8x1xf32, #tpu.memory_space<vmem>>, vector<8x1xf32>
    %8 = arith.subf %5, %6 : vector<8x32xf32>
    %cst = arith.constant 9.99999997E-7 : f32
    %9 = vector.broadcast %cst : f32 to vector<8x32xf32>
    %10 = arith.addf %8, %9 : vector<8x32xf32>
    %11 = arith.mulf %10, %10 : vector<8x32xf32>
    %cst_6 = arith.constant dense<0.000000e+00> : vector<8xf32>
    %12 = vector.multi_reduction <add>, %11, %cst_6 [1] : vector<8x32xf32> to vector<8xf32>
    %13 = vector.shape_cast %12 : vector<8xf32> to vector<8x1xf32>
    %14 = math.sqrt %13 : vector<8x1xf32>
    %cst_7 = arith.constant 2.000000e+00 : f32
    %15 = vector.broadcast %cst_7 : f32 to vector<8x1xf32>
    %16 = arith.subf %15, %14 : vector<8x1xf32>
    %cst_8 = arith.constant 0.000000e+00 : f32
    %17 = vector.broadcast %cst_8 : f32 to vector<8x1xf32>
    %18 = arith.maximumf %16, %17 : vector<8x1xf32>
    %cst_9 = arith.constant 1.000000e+00 : f32
    %19 = vector.broadcast %cst_9 : f32 to vector<8x1xf32>
    %20 = arith.subf %19, %7 : vector<8x1xf32>
    %21 = arith.mulf %20, %13 : vector<8x1xf32>
    %22 = arith.mulf %18, %18 : vector<8x1xf32>
    %23 = arith.mulf %7, %22 : vector<8x1xf32>
    %24 = arith.addf %21, %23 : vector<8x1xf32>
    %25 = tpu.iota {dimensions = array<i32: 0>} : vector<8x1xi32>
    %c8_i32 = arith.constant 8 : i32
    %26 = arith.muli %1, %c8_i32 : i32
    %27 = vector.broadcast %26 : i32 to vector<8x1xi32>
    %28 = arith.addi %25, %27 : vector<8x1xi32>
    %c8_i32_10 = arith.constant 8 : i32
    %29 = vector.broadcast %c8_i32_10 : i32 to vector<8x1xi32>
    %30 = arith.cmpi slt, %28, %29 : vector<8x1xi32>
    %cst_11 = arith.constant 0.000000e+00 : f32
    %31 = vector.broadcast %cst_11 : f32 to vector<8x1xf32>
    %32 = arith.select %30, %24, %31 : vector<8x1xi1>, vector<8x1xf32>
    %c0_12 = arith.constant 0 : index
    %c0_13 = arith.constant 0 : index
    %33 = vector.load %arg6[%c0_12, %c0_13] : memref<8x1xf32, #tpu.memory_space<vmem>>, vector<8x1xf32>
    %34 = arith.addf %33, %32 : vector<8x1xf32>
    %c0_14 = arith.constant 0 : index
    %c0_15 = arith.constant 0 : index
    %35 = vector.load %arg6[%c0_14, %c0_15] : memref<8x1xf32, #tpu.memory_space<vmem>>, vector<8x1xf32>
    tpu.vector_store %arg6[%c0_14, %c0_15], %34 {strides = array<i32>} : memref<8x1xf32, #tpu.memory_space<vmem>>, vector<8x1xf32>,
    %c0_i32_16 = arith.constant 0 : i32
    %36 = arith.cmpi eq, %arg1, %c0_i32_16 : i32
    %37 = arith.extui %36 : i1 to i32
    %c0_i32_17 = arith.constant 0 : i32
    %38 = arith.cmpi ne, %37, %c0_i32_17 : i32
    scf.if %38 {
      %c0_18 = arith.constant 0 : index
      %c0_19 = arith.constant 0 : index
      %39 = vector.load %arg6[%c0_18, %c0_19] : memref<8x1xf32, #tpu.memory_space<vmem>>, vector<8x1xf32>
      %cst_20 = arith.constant dense<0.000000e+00> : vector<1xf32>
      %40 = vector.multi_reduction <add>, %39, %cst_20 [0] : vector<8x1xf32> to vector<1xf32>
      %41 = vector.shape_cast %40 : vector<1xf32> to vector<1x1xf32>
      %42 = vector.shape_cast %41 : vector<1x1xf32> to vector<1x1x1xf32>
      %c0_21 = arith.constant 0 : index
      %c0_22 = arith.constant 0 : index
      %c0_23 = arith.constant 0 : index
      %43 = vector.load %arg5[%c0_21, %c0_22, %c0_23] : memref<1x1x1xf32, #tpu.memory_space<vmem>>, vector<1x1x1xf32>
      tpu.vector_store %arg5[%c0_21, %c0_22, %c0_23], %42 {strides = array<i32>} : memref<1x1x1xf32, #tpu.memory_space<vmem>>, vector<1x1x1xf32>,
    } else {
    }
    return
  }
  func.func @transform_0(%arg0: i32, %arg1: i32) -> (i32, i32) {
    %c1_i32 = arith.constant 1 : i32
    %0 = arith.muli %arg0, %c1_i32 : i32
    %1 = arith.addi %0, %arg1 : i32
    %c0_i32 = arith.constant 0 : i32
    %2 = arith.minsi %1, %c0_i32 : i32
    %c0_i32_0 = arith.constant 0 : i32
    %c0_i32_1 = arith.constant 0 : i32
    return %2, %c0_i32_0 : i32, i32
  }
  func.func @transform_1(%arg0: i32, %arg1: i32) -> (i32, i32) {
    %c1_i32 = arith.constant 1 : i32
    %0 = arith.muli %arg0, %c1_i32 : i32
    %1 = arith.addi %0, %arg1 : i32
    %c0_i32 = arith.constant 0 : i32
    %2 = arith.minsi %1, %c0_i32 : i32
    %c0_i32_0 = arith.constant 0 : i32
    %c0_i32_1 = arith.constant 0 : i32
    return %2, %c0_i32_0 : i32, i32
  }
  func.func @transform_2(%arg0: i32, %arg1: i32) -> (i32, i32) {
    %c1_i32 = arith.constant 1 : i32
    %0 = arith.muli %arg0, %c1_i32 : i32
    %1 = arith.addi %0, %arg1 : i32
    %c0_i32 = arith.constant 0 : i32
    %2 = arith.minsi %1, %c0_i32 : i32
    %c0_i32_0 = arith.constant 0 : i32
    %c0_i32_1 = arith.constant 0 : i32
    return %2, %c0_i32_0 : i32, i32
  }
  func.func @transform_3(%arg0: i32, %arg1: i32) -> (i32, i32, i32) {
    %c0_i32 = arith.constant 0 : i32
    %c0_i32_0 = arith.constant 0 : i32
    %c0_i32_1 = arith.constant 0 : i32
    return %arg0, %c0_i32, %c0_i32_0 : i32, i32, i32
  }
}

</mosaic_0001>

<llo_original>
// kernel: tpu_custom_call.1
$region0: #{tpu_custom_call.1}
  #allocation0 [shape = 'u32[]', space=smem, size = 0x4, offset = 0x4, fixed_abs, tag = 'smem constant byte address 0x4 - core index']
  #allocation1 [shape = 'u32[72,128]{1,0:T(1,128)}', space=vmem, size = 0x9000, scoped, tag = 'internal scratch']
  #allocation2 [shape = 'f32[8,1]{1,0:T(8,128)}', space=vmem, size = 0x1000, scoped, tag = 'scratch operand']
  %s0 = inlined_call_operand.vmem [shape: f32[8,32], index: 0, kind: input, shape index: {}]
  %s1 = inlined_call_operand.hbm [shape: f32[8,32], index: 1, kind: input, shape index: {}]
  %s2 = inlined_call_operand.vmem [shape: f32[8,1], index: 2, kind: input, shape index: {}]
  %s3 = inlined_call_operand.hbm [shape: f32[1,1,1], index: 3, kind: output, shape index: {}]
  %s4 = sld [smem:[#allocation0]]
  $region34: #{tpu_custom_call.1} parent=0
    _
  %s6 = ssub.s32 1, %s4
  %s7 = scalar_select 0, %s6, %s4
  $region1: #{tpu_custom_call.1} parent=0
    #allocation3 [shape = 'u8[4096]{0}', space=vmem, size = 0x1000, scoped, tag = 'input window, operand 1, single buffered']
    #allocation4 [shape = 's32[1]{0}', space=sflag, size = 0x4, scoped, tag = 'scoped memory for tpu_custom_call.1']
    #allocation5 [shape = 's32[1]{0}', space=sflag, size = 0x4, scoped, tag = 'scoped memory for tpu_custom_call.1']
    #allocation6 [shape = 'u8[512]{0}', space=vmem, size = 0x400, scoped, tag = 'output window, operand 0, single buffered']
    %8 = vsyncpa [#allocation4], 0
    %9 = vsyncpa [#allocation5], 0
    // Predicated region
    $region2: #{tpu_custom_call.1} parent=1 // pred_check
      _
    $region3: #{tpu_custom_call.1} parent=1 // pred_check_branch
      %11 = sbr.rel (0) target = $region5
    $region4: #{tpu_custom_call.1} parent=1 // pred_region
      %s12 = sadd.s32 0, 0
      %p13 = scmp.lt.s32.totalorder %s12, 0
      %s14 = scalar_select %p13, %s12, 0
      %p15 = scmp.lt.s32.totalorder %s14, 0
      %s16 = scalar_select %p15, %s14, 0
      %s17 = smul.addr %s16, 8
      %s18 = scalar_lea.vmem %s0, %s17
      %s19 = sadd.s32 0, 0
      %p20 = scmp.lt.s32.totalorder %s19, 0
      %s21 = scalar_select %p20, %s19, 0
    $region5: #{tpu_custom_call.1} parent=1 // pred_fallthru
      _
    // Predicated region
    $region6: #{tpu_custom_call.1} parent=1 // pred_check
      _
    $region7: #{tpu_custom_call.1} parent=1 // pred_check_branch
      %23 = sbr.rel (0) target = $region9
    $region8: #{tpu_custom_call.1} parent=1 // pred_region
      %s24 = sadd.s32 0, 0
      %p25 = scmp.lt.s32.totalorder %s24, 0
      %s26 = scalar_select %p25, %s24, 0
      %28 = vsyncadd [#allocation4], 0
      %s29 = smul.addr %s26, 8
      %s30 = scalar_lea.hbm %s1, %s29
      %s32 = sshll.u32 %s30, 4
      %s33 = int_to_ptr.hbm [resolvable:$true] %s32
      %s34 = sshll.u32 [#allocation3], 4
      %s35 = int_to_ptr.vmem [resolvable:$true] %s34
      %37 = dma.hbm_to_vmem [thread:$0]  %s33, 128, %s35, [#allocation4]
    $region9: #{tpu_custom_call.1} parent=1 // pred_fallthru
      _
    // Predicated region
    $region10: #{tpu_custom_call.1} parent=1 // pred_check
      _
    $region11: #{tpu_custom_call.1} parent=1 // pred_check_branch
      %39 = sbr.rel (0) target = $region13
    $region12: #{tpu_custom_call.1} parent=1 // pred_region
      %s40 = sadd.s32 0, 0
      %p41 = scmp.lt.s32.totalorder %s40, 0
      %s42 = scalar_select %p41, %s40, 0
      %p43 = scmp.lt.s32.totalorder %s42, 0
      %s44 = scalar_select %p43, %s42, 0
      %s45 = smul.addr %s44, 8
      %s46 = scalar_lea.vmem %s2, %s45
      %s47 = sadd.s32 0, 0
      %p48 = scmp.lt.s32.totalorder %s47, 0
      %s49 = scalar_select %p48, %s47, 0
    $region13: #{tpu_custom_call.1} parent=1 // pred_fallthru
      _
    // Predicated region
    $region14: #{tpu_custom_call.1} parent=1 // pred_check
      _
    $region15: #{tpu_custom_call.1} parent=1 // pred_check_branch
      %51 = sbr.rel (0) target = $region17
    $region16: #{tpu_custom_call.1} parent=1 // pred_region
      %53 = dma.done [#allocation4], 128
    $region17: #{tpu_custom_call.1} parent=1 // pred_fallthru
      _
    %s54 = sadd.s32 0, 0
    %p55 = scmp.lt.s32.totalorder %s54, 0
    %s56 = scalar_select %p55, %s54, 0
    %p57 = scmp.lt.s32.totalorder %s56, 0
    %s58 = scalar_select %p57, %s56, 0
    %s59 = smul.addr %s58, 8
    %s60 = scalar_lea.vmem %s0, %s59
    %s61 = sadd.s32 0, 0
    %p62 = scmp.lt.s32.totalorder %s61, 0
    %s63 = scalar_select %p62, %s61, 0
    %p64 = scmp.lt.s32.totalorder %s63, 0
    %s65 = scalar_select %p64, %s63, 0
    %s66 = smul.addr %s65, 8
    %s67 = scalar_lea.vmem %s2, %s66
    %s68 = sadd.s32 0, 0
    %p69 = scmp.lt.s32.totalorder %s68, 0
    %s70 = scalar_select %p69, %s68, 0
    %p71 = scmp.lt.s32.totalorder %s70, 0
    %s72 = scalar_select %p71, %s70, 0
    %s73 = smul.addr %s72, 8
    %s74 = scalar_lea.vmem %s0, %s73
    %s75 = sadd.s32 0, 0
    %p76 = scmp.lt.s32.totalorder %s75, 0
    %s77 = scalar_select %p76, %s75, 0
    %s78 = sadd.s32 0, 0
    %p79 = scmp.lt.s32.totalorder %s78, 0
    %s80 = scalar_select %p79, %s78, 0
    %s81 = sadd.s32 0, 0
    %p82 = scmp.lt.s32.totalorder %s81, 0
    %s83 = scalar_select %p82, %s81, 0
    %p84 = scmp.lt.s32.totalorder %s83, 0
    %s85 = scalar_select %p84, %s83, 0
    %s86 = smul.addr %s85, 8
    %s87 = scalar_lea.vmem %s2, %s86
    %s88 = sadd.s32 0, 0
    %p89 = scmp.lt.s32.totalorder %s88, 0
    %s90 = scalar_select %p89, %s88, 0
    %s91 = sadd.s32 0, 0
    %p92 = scmp.eq.s32.totalorder 0, 0
    // Predicated region
    $region18: #{tpu_custom_call.1} parent=1 // pred_check
      %p93 = pneg %p92
    $region19: #{tpu_custom_call.1} parent=1 // pred_check_branch
      %95 = sbr.rel (%p93) target = $region21
    $region20: #{tpu_custom_call.1} parent=1 // pred_region
      %vm96 = vcmask 7168
      %97 = vst.msk [vmem:[#allocation2] sm:$0xff] %vm96, 0.0
    $region21: #{tpu_custom_call.1} parent=1 // pred_fallthru
      _
    %v98 = vld [vmem:[%s74] sm:$0xff]
    %v99 = vld [vmem:[#allocation3] sm:$0xff]
    %v100 = vld [vmem:[%s87] sm:$0xff]
    %v101 = vsub.f32 %v98, %v99
    %v102 = vadd.f32 %v101, 1e-06
    %v103 = vmul.f32 %v102, %v102
    %vm104 = vcmask 261120
    %v105 = vsel %vm104, %v103, 0.0
    %106 = vadd.xlane.f32.xlu0 %v105
    %v107 = vpop.xlane.xlu0 %106
    %v108 = vrsqrt.pop %v107
    %v109 = vmul.f32 %v108, %v107
    %v110 = vmul.f32 %v109, %v108
    %v111 = vmul.f32 0.5, %v110
    %v112 = vsub.f32 1.5, %v111
    %v113 = vmul.f32 %v108, %v112
    %v114 = vmul.f32 %v107, %v113
    %vm115 = vcmp.eq.f32.partialorder %v107, inf
    %v116 = vsel %vm115, %v107, %v114
    %vm117 = vcmp.eq.f32.partialorder %v107, 0.0
    %v118 = vand.u32 %v107, 2147483648
    %v119 = vsel %vm117, %v118, %v116
    %v120 = vsub.f32 2.0, %v119
    %v121 = vmax.f32 %v120, 0.0
    %v122 = vsub.f32 1.0, %v100
    %v123 = vmul.f32 %v122, %v107
    %v124 = vmul.f32 %v121, %v121
    %v125 = vmul.f32 %v100, %v124
    %v126 = vadd.f32 %v123, %v125
    %v127 = vlaneseq
    %v128 = vshrl.u32 %v127, 7
    %s129 = smul.u32 %s91, 8
    %v130 = vstv %s129
    %v131 = vadd.s32 %v128, %v130
    %vm132 = vcmp.lt.s32.totalorder %v131, 8
    %v133 = vsel %vm132, %v126, 0.0
    %v134 = vld [vmem:[#allocation2] sm:$0xff]
    %v135 = vadd.f32 %v134, %v133
    %vm136 = vcmask 7168
    %137 = vst.msk [vmem:[#allocation2] sm:$0xff] %vm136, %v135
    // Predicated region
    $region22: #{tpu_custom_call.1} parent=1 // pred_check
      %p138 = pneg %p92
    $region23: #{tpu_custom_call.1} parent=1 // pred_check_branch
      %140 = sbr.rel (%p138) target = $region25
    $region24: #{tpu_custom_call.1} parent=1 // pred_region
      %v141 = vld [vmem:[#allocation2] sm:$0xff]
      %v142 = vsel %vm136, %v141, 0.0
      %v143 = vrot.slane %v142, 4
      %v144 = vadd.f32 %v142, %v143
      %v145 = vrot.slane %v144, 2
      %v146 = vadd.f32 %v144, %v145
      %v147 = vrot.slane %v146, 1
      %v148 = vadd.f32 %v146, %v147
      %vm149 = vcmask 0
      %150 = vst.msk [vmem:[#allocation6] sm:$0x1] %vm149, %v148
    $region25: #{tpu_custom_call.1} parent=1 // pred_fallthru
      _
    // Predicated region
    $region26: #{tpu_custom_call.1} parent=1 // pred_check
      _
    $region27: #{tpu_custom_call.1} parent=1 // pred_check_branch
      %152 = sbr.rel (0) target = $region29
    $region28: #{tpu_custom_call.1} parent=1 // pred_region
      %154 = vsyncadd [#allocation5], 0
      %s156 = sshll.u32 [#allocation6], 4
      %s157 = int_to_ptr.vmem [resolvable:$true] %s156
      %s158 = sshll.u32 %s3, 4
      %s159 = int_to_ptr.hbm [resolvable:$true] %s158
      %161 = dma.vmem_to_hbm [thread:$0]  %s157, 16, %s159, [#allocation5]
    $region29: #{tpu_custom_call.1} parent=1 // pred_fallthru
      _
    // Predicated region
    $region30: #{tpu_custom_call.1} parent=1 // pred_check
      _
    $region31: #{tpu_custom_call.1} parent=1 // pred_check_branch
      %163 = sbr.rel (0) target = $region33
    $region32: #{tpu_custom_call.1} parent=1 // pred_region
      %165 = dma.done [#allocation5], 16
    $region33: #{tpu_custom_call.1} parent=1 // pred_fallthru
      _
    %166 = vsyncpa [#allocation4], 1
    %167 = vsyncpa [#allocation5], 1

</llo_original>
